<compile_context>
chip_gen: v7x
topology: tpu7x:2x2x1
jax: 0.10.0
libtpu: 0.0.40
codegen_flags: <defaults>
</compile_context>

<pallas_src>
import functools
import math

import jax
import jax.numpy as jnp
from jax.experimental import pallas as pl
from jax.experimental.pallas import tpu as pltpu


def _round_up(v, m):
    return -(-v // m) * m


def _vmem_budget_bytes():
    """~70% of per-core VMEM (64 MiB on v7x, 128 MiB on v5e/v6e)."""
    try:
        cap = pltpu.get_tpu_info().vmem_capacity_bytes
    except Exception:
        cap = 64 * 1024 * 1024  # conservative fallback (v7x per-TC VMEM)
    return int(cap * 0.7)


def _plan_tiles(in_dim, out_dim, in_bytes, out_bytes, tm_max, tn_max, tk_max, budget):
    """Pick lane-dense tile sizes whose double-buffered footprint fits the VMEM budget."""
    lane_k = 256 if in_dim >= 256 else 128   # v6e/v7x MXU is 2x256^2
    lane_n = 256 if out_dim >= 256 else 128

    def mk(tm_cap, tn_cap, tk_cap):
        tk = min(tk_cap, _round_up(in_dim, lane_k))
        tn = min(tn_cap, _round_up(out_dim, lane_n))
        Kp = _round_up(in_dim, tk)
        Np = _round_up(out_dim, tn)
        multi_k = (Kp // tk) > 1
        foot = (2 * (tm_cap * tk + tk * tn) * in_bytes      # double-buffered x, W tiles
                + 2 * tn * 4                                # bias tile
                + 2 * tm_cap * tn * out_bytes               # output tiles
                + (tm_cap * tn * 4 if multi_k else 0))      # f32 accumulator scratch
        return tm_cap, tn, tk, Kp, Np, foot

    tm_cap, tn_cap, tk_cap = tm_max, tn_max, tk_max
    while True:
        tm, tn, tk, Kp, Np, foot = mk(tm_cap, tn_cap, tk_cap)
        if foot <= budget:
            break
        # Shrink order: tm (no padding impact), then tk, then tn, then tm again.
        if tm_cap > 64:
            tm_cap //= 2
        elif tk_cap > 512:
            tk_cap //= 2
        elif tn_cap > 256:
            tn_cap //= 2
        elif tm_cap > 8:
            tm_cap //= 2
        else:
            break
    return dict(tm_max=tm, tn=tn, tk=tk, Kp=Kp, Np=Np)


# ---------------------------------------------------------------------------
# Kernels
# ---------------------------------------------------------------------------

def _mapping_linear_kernel_single_k(x_ref, w_ref, b_ref, o_ref, *, use_act, neg_slope):
    # Full-K contraction in one shot (weight-streaming regime); no scratch needed.
    out = jnp.dot(x_ref[...], w_ref[...], preferred_element_type=jnp.float32)
    out = out + b_ref[...]                                   # (tm,tn) + (1,tn) broadcast
    if use_act:                                              # fused_leaky_relu, scale=1
        out = jnp.where(out >= 0, out, neg_slope * out)
    o_ref[...] = out.astype(o_ref.dtype)


def _mapping_linear_kernel_multi_k(x_ref, w_ref, b_ref, o_ref, acc_ref,
                                   *, use_act, neg_slope):
    # Used only when the K grid extent is >= 2.
    k = pl.program_id(2)
    last = pl.num_programs(2) - 1
    part = jnp.dot(x_ref[...], w_ref[...], preferred_element_type=jnp.float32)

    @pl.when(k == 0)
    def _():
        acc_ref[...] = part                                  # no zero-init pass

    @pl.when(jnp.logical_and(k > 0, k < last))
    def _():
        acc_ref[...] = acc_ref[...] + part

    @pl.when(k == last)
    def _():
        # Fuse the final partial + bias + activation into the output store
        # (avoids storing into acc and immediately reloading it).
        out = acc_ref[...] + part + b_ref[...]
        if use_act:
            out = jnp.where(out >= 0, out, neg_slope * out)
        o_ref[...] = out.astype(o_ref.dtype)


# ---------------------------------------------------------------------------
# Parameter preparation (one-time, out of the forward path)
# ---------------------------------------------------------------------------

def prepare_mapping_linear_params(weight, bias=None, *, compute_dtype=jnp.bfloat16,
                                  tm_max=512, tn_max=1024, tk_max=2048):
    """One-time re-layout of MappingLinear parameters.

    weight: (out_dim, in_dim).  Returns the (Kp, Np)-padded, transposed weight in the
    MXU compute dtype, the (1, Np) f32 bias, and the tile plan.  Call once at model
    setup; do NOT call per forward step.
    """
    out_dim, in_dim = weight.shape
    compute_dtype = jnp.dtype(compute_dtype)
    budget = _vmem_budget_bytes()
    plan = _plan_tiles(in_dim, out_dim, compute_dtype.itemsize, 4,
                       tm_max, tn_max, tk_max, budget)
    Kp, Np = plan["Kp"], plan["Np"]

    # Zero padding of K/N is exact for a matmul; weight presented as (K, N).
    w_kn = jnp.pad(weight.astype(compute_dtype).T,
                   ((0, Kp - in_dim), (0, Np - out_dim)))
    if bias is None:
        b_1n = jnp.zeros((1, Np), jnp.float32)
    else:
        b_1n = jnp.pad(bias.astype(jnp.float32).reshape(1, out_dim),
                       ((0, 0), (0, Np - out_dim)))

    return dict(w_kn=w_kn, b_1n=b_1n, in_dim=in_dim, out_dim=out_dim,
                compute_dtype=compute_dtype, plan=plan, vmem_budget=budget)


# ---------------------------------------------------------------------------
# Forward
# ---------------------------------------------------------------------------

def mapping_linear_apply(x, params, activation=None, *, neg_slope=0.2):
    """Forward of MappingLinear using pre-layouted params. x: (..., in_dim)."""
    in_dim = params["in_dim"]
    out_dim = params["out_dim"]
    assert x.shape[-1] == in_dim
    lead = x.shape[:-1]
    x2 = x.reshape(-1, in_dim)
    M = x2.shape[0]

    plan = params["plan"]
    tk, Kp, Np = plan["tk"], plan["Kp"], plan["Np"]
    tn = plan["tn"]
    tm = min(plan["tm_max"], _round_up(M, 8))
    Mp = _round_up(M, tm)

    # v7x megacore: make sure at least one "parallel" grid axis has extent >= 2.
    if Mp // tm == 1 and Np // tn == 1 and tn % 256 == 0:
        tn //= 2

    nk = Kp // tk
    compute_dtype = params["compute_dtype"]

    xp = x2
    if (Mp, Kp) != (M, in_dim):
        xp = jnp.pad(x2, ((0, Mp - M), (0, Kp - in_dim)))
    xp = xp.astype(compute_dtype)

    out_dtype = x.dtype
    in_isz = compute_dtype.itemsize
    cost = pl.CostEstimate(
        flops=2 * Mp * Np * Kp,
        transcendentals=0,
        bytes_accessed=(Mp * Kp * (Np // tn) * in_isz          # x re-read per N tile
                        + Kp * Np * (Mp // tm) * in_isz        # W re-read per M tile
                        + Mp * Np * jnp.dtype(out_dtype).itemsize
                        + Np * 4),
    )

    use_act = activation is not None
    if nk == 1:
        kernel = functools.partial(_mapping_linear_kernel_single_k,
                                   use_act=use_act, neg_slope=neg_slope)
        grid = (Mp // tm, Np // tn)
        in_specs = [pl.BlockSpec((tm, Kp), lambda i, j: (i, 0)),
                    pl.BlockSpec((Kp, tn), lambda i, j: (0, j)),
                    pl.BlockSpec((1, tn), lambda i, j: (0, j))]
        out_specs = pl.BlockSpec((tm, tn), lambda i, j: (i, j))
        scratch_shapes = []
        dims = ("parallel", "parallel")
    else:
        kernel = functools.partial(_mapping_linear_kernel_multi_k,
                                   use_act=use_act, neg_slope=neg_slope)
        grid = (Mp // tm, Np // tn, nk)
        in_specs = [pl.BlockSpec((tm, tk), lambda i, j, k: (i, k)),
                    pl.BlockSpec((tk, tn), lambda i, j, k: (k, j)),
                    pl.BlockSpec((1, tn), lambda i, j, k: (0, j))]
        out_specs = pl.BlockSpec((tm, tn), lambda i, j, k: (i, j))
        scratch_shapes = [pltpu.VMEM((tm, tn), jnp.float32)]
        dims = ("parallel", "parallel", "arbitrary")

    out = pl.pallas_call(
        kernel,
        out_shape=jax.ShapeDtypeStruct((Mp, Np), out_dtype),
        grid_spec=pltpu.PrefetchScalarGridSpec(
            num_scalar_prefetch=0,
            grid=grid,
            in_specs=in_specs,
            out_specs=out_specs,
            scratch_shapes=scratch_shapes,
        ),
        compiler_params=pltpu.CompilerParams(
            dimension_semantics=dims,
            vmem_limit_bytes=params["vmem_budget"]),
        cost_estimate=cost,
    )(xp, params["w_kn"], params["b_1n"])

    return out[:M, :out_dim].reshape(lead + (out_dim,))


def mapping_linear(x, weight, bias=None, activation=None, *,
                   compute_dtype=jnp.bfloat16, **tile_kwargs):
    """Convenience one-shot call.  NOTE: re-layouts the weight each call; for repeated
    use, call prepare_mapping_linear_params() once and mapping_linear_apply() per step."""
    params = prepare_mapping_linear_params(weight, bias, compute_dtype=compute_dtype,
                                           **tile_kwargs)
    return mapping_linear_apply(x, params, activation=activation)


# ---------------------------------------------------------------------------
# Reference + test harness
# ---------------------------------------------------------------------------

def _reference(x, weight, bias, activation):
    y = jnp.einsum("...k,nk->...n", x, weight,
                   precision=jax.lax.Precision.HIGHEST)
    if activation is not None:
        if bias is not None:
            y = y + bias.reshape((1,) * (y.ndim - 1) + (-1,))
        return jnp.where(y >= 0, y, 0.2 * y)  # fused_leaky_relu with scale = 1
    if bias is not None:
        y = y + bias.reshape((1,) * (y.ndim - 1) + (-1,))
    return y


if __name__ == "__main__":
    key = jax.random.PRNGKey(0)
    k_x, k_w, k_b, k_x2, k_w2 = jax.random.split(key, 5)

    # Small config consistent with MappingLinear(in_dim=32, out_dim=64).
    batch, seq, in_dim, out_dim = 2, 8, 32, 64
    x = jax.random.normal(k_x, (batch, seq, in_dim), dtype=jnp.float32)

    # Emulate weight_std * kaiming_normal(a=0.2, fan_in) and uniform(+-1/sqrt(in_dim)) bias.
    gain = math.sqrt(2.0 / (1.0 + 0.2 ** 2))
    weight = (gain / math.sqrt(in_dim)) * jax.random.normal(
        k_w, (out_dim, in_dim), dtype=jnp.float32)
    bound = math.sqrt(1.0 / in_dim)
    bias = jax.random.uniform(k_b, (out_dim,), jnp.float32, -bound, bound)

    # --- f32 compute path (tight check against HIGHEST-precision reference) ----------
    params_f32 = prepare_mapping_linear_params(weight, bias, compute_dtype=jnp.float32)

    out_lin = jax.block_until_ready(mapping_linear_apply(x, params_f32, activation=None))
    ref_lin = _reference(x, weight, bias, None)
    assert out_lin.shape == (batch, seq, out_dim)
    assert jnp.allclose(out_lin, ref_lin, atol=1e-4, rtol=1e-4)

    out_act = jax.block_until_ready(
        mapping_linear_apply(x, params_f32, activation="fused_lrelu"))
    ref_act = _reference(x, weight, bias, "fused_lrelu")
    assert jnp.allclose(out_act, ref_act, atol=1e-4, rtol=1e-4)

    # --- default bf16-fed MXU path, checked against a bf16-cast reference ------------
    params_bf16 = prepare_mapping_linear_params(weight, bias)   # compute_dtype = bf16
    out_bf = jax.block_until_ready(
        mapping_linear_apply(x, params_bf16, activation="fused_lrelu"))
    x_q = x.astype(jnp.bfloat16).astype(jnp.float32)
    w_q = weight.astype(jnp.bfloat16).astype(jnp.float32)
    ref_bf = _reference(x_q, w_q, bias, "fused_lrelu")
    assert jnp.allclose(out_bf, ref_bf, atol=1e-4, rtol=1e-4)

    # --- larger shape: multi-K grid (tk_max=512 forces 2 K steps), N-split, no bias ---
    Mb, Kb, Nb = 512, 1024, 640
    xb = jax.random.normal(k_x2, (Mb, Kb), dtype=jnp.float32)
    wb = jax.random.normal(k_w2, (Nb, Kb), dtype=jnp.float32) / math.sqrt(Kb)
    params_big = prepare_mapping_linear_params(wb, None, tk_max=512)
    out_b = jax.block_until_ready(mapping_linear_apply(xb, params_big, activation=None))
    ref_b = _reference(xb.astype(jnp.bfloat16).astype(jnp.float32),
                       wb.astype(jnp.bfloat16).astype(jnp.float32), None, None)
    assert out_b.shape == (Mb, Nb)
    assert jnp.allclose(out_b, ref_b, atol=2e-3, rtol=2e-3)

    print("KERNEL_OK")
</pallas_src>

<mosaic_0001>
module attributes {stable_mosaic.version = 11 : i64} {
  func.func @_mapping_linear_kernel_single_k(%arg0: i32, %arg1: i32, %arg2: memref<16x128xf32, #tpu.memory_space<vmem>>, %arg3: memref<128x128xf32, #tpu.memory_space<vmem>>, %arg4: memref<1x128xf32, #tpu.memory_space<vmem>>, %arg5: memref<16x128xf32, #tpu.memory_space<vmem>>) attributes {dimension_semantics = [#tpu.dimension_semantics<parallel>, #tpu.dimension_semantics<parallel>], iteration_bounds = array<i64: 1, 1>, scalar_prefetch = 0 : i64, scratch_operands = 0 : i64, tpu.core_type = #tpu.core_type<tc>, window_params = [{transform_indices = @transform_0, window_bounds = array<i64: 16, 128>}, {transform_indices = @transform_1, window_bounds = array<i64: 128, 128>}, {transform_indices = @transform_2, window_bounds = array<i64: 1, 128>}, {transform_indices = @transform_3, window_bounds = array<i64: 16, 128>}]} {
    %c0 = arith.constant 0 : index
    %c0_0 = arith.constant 0 : index
    %0 = vector.load %arg2[%c0, %c0_0] : memref<16x128xf32, #tpu.memory_space<vmem>>, vector<16x128xf32>
    %c0_1 = arith.constant 0 : index
    %c0_2 = arith.constant 0 : index
    %1 = vector.load %arg3[%c0_1, %c0_2] : memref<128x128xf32, #tpu.memory_space<vmem>>, vector<128x128xf32>
    %cst = arith.constant dense<0.000000e+00> : vector<16x128xf32>
    %2 = tpu.matmul %0, %1, %cst {dimension_numbers = #tpu.dot_dimension_numbers<[1], [0], [0], [1], [0, 0, 1, 1], [], []>} : vector<16x128xf32>, vector<128x128xf32>, vector<16x128xf32> -> vector<16x128xf32>
    %c0_3 = arith.constant 0 : index
    %c0_4 = arith.constant 0 : index
    %3 = vector.load %arg4[%c0_3, %c0_4] : memref<1x128xf32, #tpu.memory_space<vmem>>, vector<1x128xf32>
    %4 = vector.broadcast %3 : vector<1x128xf32> to vector<16x128xf32>
    %5 = arith.addf %2, %4 : vector<16x128xf32>
    %c0_5 = arith.constant 0 : index
    %c0_6 = arith.constant 0 : index
    %6 = vector.load %arg5[%c0_5, %c0_6] : memref<16x128xf32, #tpu.memory_space<vmem>>, vector<16x128xf32>
    tpu.vector_store %arg5[%c0_5, %c0_6], %5 {strides = array<i32>} : memref<16x128xf32, #tpu.memory_space<vmem>>, vector<16x128xf32>,
    return
  }
  func.func @transform_0(%arg0: i32, %arg1: i32) -> (i32, i32) {
    %c0_i32 = arith.constant 0 : i32
    %c0_i32_0 = arith.constant 0 : i32
    return %arg0, %c0_i32 : i32, i32
  }
  func.func @transform_1(%arg0: i32, %arg1: i32) -> (i32, i32) {
    %c0_i32 = arith.constant 0 : i32
    %c0_i32_0 = arith.constant 0 : i32
    return %c0_i32, %arg1 : i32, i32
  }
  func.func @transform_2(%arg0: i32, %arg1: i32) -> (i32, i32) {
    %c0_i32 = arith.constant 0 : i32
    %c0_i32_0 = arith.constant 0 : i32
    return %c0_i32, %arg1 : i32, i32
  }
  func.func @transform_3(%arg0: i32, %arg1: i32) -> (i32, i32) {
    %c0_i32 = arith.constant 0 : i32
    return %arg0, %arg1 : i32, i32
  }
}

</mosaic_0001>

<llo_original>
// kernel: tpu_custom_call.1
$region0: #{tpu_custom_call.1}
  #allocation0 [shape = 'u32[]', space=smem, size = 0x4, offset = 0x4, fixed_abs, tag = 'smem constant byte address 0x4 - core index']
  #allocation1 [shape = 'u32[144,128]{1,0:T(1,128)}', space=vmem, size = 0x12000, scoped, tag = 'internal scratch']
  %s0 = inlined_call_operand.hbm [shape: f32[16,128], index: 0, kind: input, shape index: {}]
  %s1 = inlined_call_operand.hbm [shape: f32[128,128], index: 1, kind: input, shape index: {}]
  %s2 = inlined_call_operand.vmem [shape: f32[1,128], index: 2, kind: input, shape index: {}]
  %s3 = inlined_call_operand.hbm [shape: f32[16,128], index: 3, kind: output, shape index: {}]
  %s4 = sld [smem:[#allocation0]]
  $region30: #{tpu_custom_call.1} parent=0
    _
  %s6 = ssub.s32 1, %s4
  %s7 = scalar_select 0, %s6, %s4
  $region1: #{tpu_custom_call.1} parent=0
    #allocation2 [shape = 'u8[8192]{0}', space=vmem, size = 0x2000, scoped, tag = 'input window, operand 0, single buffered']
    #allocation3 [shape = 's32[1]{0}', space=sflag, size = 0x4, scoped, tag = 'scoped memory for tpu_custom_call.1']
    #allocation4 [shape = 's32[1]{0}', space=sflag, size = 0x4, scoped, tag = 'scoped memory for tpu_custom_call.1']
    #allocation5 [shape = 'u8[65536]{0}', space=vmem, size = 0x10000, scoped, tag = 'input window, operand 1, single buffered']
    #allocation6 [shape = 's32[1]{0}', space=sflag, size = 0x4, scoped, tag = 'scoped memory for tpu_custom_call.1']
    #allocation7 [shape = 'u8[8192]{0}', space=vmem, size = 0x2000, scoped, tag = 'output window, operand 0, single buffered']
    %8 = vsyncpa [#allocation3], 0
    %9 = vsyncpa [#allocation6], 0
    %10 = vsyncpa [#allocation4], 0
    // Predicated region
    $region2: #{tpu_custom_call.1} parent=1 // pred_check
      _
    $region3: #{tpu_custom_call.1} parent=1 // pred_check_branch
      %12 = sbr.rel (0) target = $region5
    $region4: #{tpu_custom_call.1} parent=1 // pred_region
      %s14 = ssub.s32 256, 256
      %15 = vsyncadd [#allocation3], %s14
      %s16 = sshll.u32 [#allocation2], 4
      %s17 = int_to_ptr.vmem [resolvable:$true] %s16
      %22 = dma.hbm_to_vmem [thread:$0]  %s0, 256, %s17, [#allocation3], 128, 128, 8
    $region5: #{tpu_custom_call.1} parent=1 // pred_fallthru
      _
    // Predicated region
    $region6: #{tpu_custom_call.1} parent=1 // pred_check
      _
    $region7: #{tpu_custom_call.1} parent=1 // pred_check_branch
      %24 = sbr.rel (0) target = $region9
    $region8: #{tpu_custom_call.1} parent=1 // pred_region
      %s26 = ssub.s32 2048, 2048
      %27 = vsyncadd [#allocation6], %s26
      %s28 = sshll.u32 [#allocation5], 4
      %s29 = int_to_ptr.vmem [resolvable:$true] %s28
      %34 = dma.hbm_to_vmem [thread:$0]  %s1, 2048, %s29, [#allocation6], 128, 128, 8
    $region9: #{tpu_custom_call.1} parent=1 // pred_fallthru
      _
    // Predicated region
    $region10: #{tpu_custom_call.1} parent=1 // pred_check
      _
    $region11: #{tpu_custom_call.1} parent=1 // pred_check_branch
      %36 = sbr.rel (0) target = $region13
    $region12: #{tpu_custom_call.1} parent=1 // pred_region
      _
    $region13: #{tpu_custom_call.1} parent=1 // pred_fallthru
      _
    // Predicated region
    $region14: #{tpu_custom_call.1} parent=1 // pred_check
      _
    $region15: #{tpu_custom_call.1} parent=1 // pred_check_branch
      %38 = sbr.rel (0) target = $region17
    $region16: #{tpu_custom_call.1} parent=1 // pred_region
      %39 = dma.done [#allocation3], 256
    $region17: #{tpu_custom_call.1} parent=1 // pred_fallthru
      _
    // Predicated region
    $region18: #{tpu_custom_call.1} parent=1 // pred_check
      _
    $region19: #{tpu_custom_call.1} parent=1 // pred_check_branch
      %41 = sbr.rel (0) target = $region21
    $region20: #{tpu_custom_call.1} parent=1 // pred_region
      %42 = dma.done [#allocation6], 2048
    $region21: #{tpu_custom_call.1} parent=1 // pred_fallthru
      _
    %v43 = vld [vmem:[#allocation2] sm:$0xff]
    %v44 = vld [vmem:[#allocation2 + $0x8] sm:$0xff]
    %v45 = vld [vmem:[#allocation5] sm:$0xff]
    %v46 = vld [vmem:[#allocation5 + $0x8] sm:$0xff]
    %v47 = vld [vmem:[#allocation5 + $0x10] sm:$0xff]
    %v48 = vld [vmem:[#allocation5 + $0x18] sm:$0xff]
    %v49 = vld [vmem:[#allocation5 + $0x20] sm:$0xff]
    %v50 = vld [vmem:[#allocation5 + $0x28] sm:$0xff]
    %v51 = vld [vmem:[#allocation5 + $0x30] sm:$0xff]
    %v52 = vld [vmem:[#allocation5 + $0x38] sm:$0xff]
    %v53 = vld [vmem:[#allocation5 + $0x40] sm:$0xff]
    %v54 = vld [vmem:[#allocation5 + $0x48] sm:$0xff]
    %v55 = vld [vmem:[#allocation5 + $0x50] sm:$0xff]
    %v56 = vld [vmem:[#allocation5 + $0x58] sm:$0xff]
    %v57 = vld [vmem:[#allocation5 + $0x60] sm:$0xff]
    %v58 = vld [vmem:[#allocation5 + $0x68] sm:$0xff]
    %v59 = vld [vmem:[#allocation5 + $0x70] sm:$0xff]
    %v60 = vld [vmem:[#allocation5 + $0x78] sm:$0xff]
    %v61 = vld [vmem:[%s2] sm:$0x1]
    %v63 = vlaneseq
    %v64 = vshrl.u32 %v63, 7
    %v65 = vsub.s32 0, %v64
    %v66 = vrot.slane %v61, %v65
    %68 = vmatprep.subr.mxu0 0.0
    %69 = vmatpush1.msra.mxu0 %v45
    %70 = vmatprep.subr.mxu0 0.0
    %71 = vmatpush1.msra.mxu0 %v46
    %72 = vmatprep.subr.mxu0 0.0
    %73 = vmatpush1.msra.mxu0 %v47
    %74 = vmatprep.subr.mxu0 0.0
    %75 = vmatpush1.msra.mxu0 %v48
    %76 = vmatprep.subr.mxu0 0.0
    %77 = vmatpush1.msra.mxu0 %v49
    %78 = vmatprep.subr.mxu0 0.0
    %79 = vmatpush1.msra.mxu0 %v50
    %80 = vmatprep.subr.mxu0 0.0
    %81 = vmatpush1.msra.mxu0 %v51
    %82 = vmatprep.subr.mxu0 0.0
    %83 = vmatpush1.msra.mxu0 %v52
    %84 = vmatprep.subr.mxu0 0.0
    %85 = vmatpush1.msra.mxu0 %v53
    %86 = vmatprep.subr.mxu0 0.0
    %87 = vmatpush1.msra.mxu0 %v54
    %88 = vmatprep.subr.mxu0 0.0
    %89 = vmatpush1.msra.mxu0 %v55
    %90 = vmatprep.subr.mxu0 0.0
    %91 = vmatpush1.msra.mxu0 %v56
    %92 = vmatprep.subr.mxu0 0.0
    %93 = vmatpush1.msra.mxu0 %v57
    %94 = vmatprep.subr.mxu0 0.0
    %95 = vmatpush1.msra.mxu0 %v58
    %96 = vmatprep.subr.mxu0 0.0
    %97 = vmatpush1.msra.mxu0 %v59
    %98 = vmatprep.subr.mxu0 0.0
    %99 = vmatpush1.msra.mxu0 %v60
    %100 = vmatprep.subr.mxu0 0.0
    %101 = vmatpush1.msra.mxu0 0.0
    %102 = vmatprep.subr.mxu0 0.0
    %103 = vmatpush1.msra.mxu0 0.0
    %104 = vmatprep.subr.mxu0 0.0
    %105 = vmatpush1.msra.mxu0 0.0
    %106 = vmatprep.subr.mxu0 0.0
    %107 = vmatpush1.msra.mxu0 0.0
    %108 = vmatprep.subr.mxu0 0.0
    %109 = vmatpush1.msra.mxu0 0.0
    %110 = vmatprep.subr.mxu0 0.0
    %111 = vmatpush1.msra.mxu0 0.0
    %112 = vmatprep.subr.mxu0 0.0
    %113 = vmatpush1.msra.mxu0 0.0
    %114 = vmatprep.subr.mxu0 0.0
    %115 = vmatpush1.msra.mxu0 0.0
    %116 = vmatprep.subr.mxu0 0.0
    %117 = vmatpush1.msra.mxu0 0.0
    %118 = vmatprep.subr.mxu0 0.0
    %119 = vmatpush1.msra.mxu0 0.0
    %120 = vmatprep.subr.mxu0 0.0
    %121 = vmatpush1.msra.mxu0 0.0
    %122 = vmatprep.subr.mxu0 0.0
    %123 = vmatpush1.msra.mxu0 0.0
    %124 = vmatprep.subr.mxu0 0.0
    %125 = vmatpush1.msra.mxu0 0.0
    %126 = vmatprep.subr.mxu0 0.0
    %127 = vmatpush1.msra.mxu0 0.0
    %128 = vmatprep.subr.mxu0 0.0
    %129 = vmatpush1.msra.mxu0 0.0
    %130 = vmatprep.subr.mxu0 0.0
    %131 = vmatpush1.msra.mxu0 0.0
    %132 = vmatprep.mubr.f32.mxu0 0.0
    %133 = vmatmul.mubr.f32.gmra.mrb[0].mxu0 %v43
    %v134 = vpop.f32.mrb[0].mxu0
    %v135 = vadd.f32 %v66, %v134
    %v136 = vpop.f32.mrb[0].mxu0
    %137 = vmatprep.mubr.f32.mxu0 0.0
    %138 = vmatmul.mubr.f32.gmra.mrb[0].mxu0 %v44
    %v139 = vpop.f32.mrb[0].mxu0
    %v140 = vadd.f32 %v66, %v139
    %v141 = vpop.f32.mrb[0].mxu0
    %142 = vdwg.mxu0
    %143 = vst [vmem:[#allocation7] sm:$0xff] %v135
    %144 = vst [vmem:[#allocation7 + $0x8] sm:$0xff] %v140
    // Predicated region
    $region22: #{tpu_custom_call.1} parent=1 // pred_check
      _
    $region23: #{tpu_custom_call.1} parent=1 // pred_check_branch
      %146 = sbr.rel (0) target = $region25
    $region24: #{tpu_custom_call.1} parent=1 // pred_region
      %s148 = ssub.s32 256, 256
      %149 = vsyncadd [#allocation4], %s148
      %s150 = sshll.u32 [#allocation7], 4
      %s151 = int_to_ptr.vmem [resolvable:$true] %s150
      %156 = dma.vmem_to_hbm [thread:$0]  %s151, 256, %s3, [#allocation4], 128, 128, 8
    $region25: #{tpu_custom_call.1} parent=1 // pred_fallthru
      _
    // Predicated region
    $region26: #{tpu_custom_call.1} parent=1 // pred_check
      _
    $region27: #{tpu_custom_call.1} parent=1 // pred_check_branch
      %158 = sbr.rel (0) target = $region29
    $region28: #{tpu_custom_call.1} parent=1 // pred_region
      %159 = dma.done [#allocation4], 256
    $region29: #{tpu_custom_call.1} parent=1 // pred_fallthru
      _
    %160 = vsyncpa [#allocation3], 1
    %161 = vsyncpa [#allocation6], 1
    %162 = vsyncpa [#allocation4], 1

</llo_original>
